<compile_context>
chip_gen: v6e
topology: v6e:2x2x1
jax: 0.10.0
libtpu: 0.0.40
codegen_flags: <defaults>
</compile_context>

<pallas_src>
import functools

import jax
import jax.numpy as jnp
from jax.experimental import pallas as pl
from jax.experimental.pallas import tpu as pltpu

_LANE = 128      # f32 lane tile
_SUBLANE = 8     # f32 sublane tile


def _round_up(x, m):
    return (x + m - 1) // m * m


def _pad2d(a, rows, cols):
    r, c = a.shape
    return jnp.pad(a, ((0, rows - r), (0, cols - c)))


def _decoder_step_kernel(tok_ref, h_ref, emb_ref, wg_ref, bg_ref,
                         wout_ref, bout_ref, logp_ref, hnew_ref, *, o_valid):
    """One fused decoder step (all operands padded to (8,128) tiles).

    tok_ref : [Bp, 1]        int32 token ids (padded rows are 0 / discarded)
    h_ref   : [Bp, Hp]  f32  previous hidden state
    emb_ref : [Op, Hp]  bf16 embedding table (padded rows are zero)
    wg_ref  : [2Hp,4Hp] bf16 fused gate weights  [r | z | i_n | h_n]
    bg_ref  : [1, 4Hp]  f32  fused gate biases   [b_ir+b_hr | b_iz+b_hz | b_in | b_hn]
    wout_ref: [Hp, Op]  bf16 output projection weights (transposed)
    bout_ref: [1, Op]   f32  output projection bias
    logp_ref: [Bp, Op]  f32  log-softmax output
    hnew_ref: [Bp, Hp]  f32  new hidden state
    """
    Bp, Hp = h_ref.shape
    Vp = emb_ref.shape[0]
    Op = logp_ref.shape[-1]

    # ---- fused embedding gather (one-hot @ table on the MXU) + ReLU --------
    tok = tok_ref[...]                                              # [Bp, 1]
    vocab_iota = jax.lax.broadcasted_iota(jnp.int32, (Bp, Vp), 1)
    onehot = jnp.where(vocab_iota == tok, 1.0, 0.0).astype(jnp.bfloat16)
    x = jnp.dot(onehot, emb_ref[...], preferred_element_type=jnp.float32)
    x = jnp.maximum(x, 0.0)                                         # F.relu

    # ---- single fused gate matmul ------------------------------------------
    h = h_ref[...]                                                  # f32
    xh = jnp.concatenate([x, h], axis=-1).astype(jnp.bfloat16)      # [Bp, 2Hp]
    gates = jnp.dot(xh, wg_ref[...],
                    preferred_element_type=jnp.float32) + bg_ref[...]

    # gate slices are whole 128-lane blocks (Hp % 128 == 0) -> no relayout
    r = jax.nn.sigmoid(gates[:, 0:Hp])
    z = jax.nn.sigmoid(gates[:, Hp:2 * Hp])
    n = jnp.tanh(gates[:, 2 * Hp:3 * Hp] + r * gates[:, 3 * Hp:4 * Hp])
    h_new = (1.0 - z) * n + z * h
    hnew_ref[...] = h_new.astype(hnew_ref.dtype)

    # ---- output projection + masked, stable log-softmax --------------------
    logits = jnp.dot(h_new.astype(jnp.bfloat16), wout_ref[...],
                     preferred_element_type=jnp.float32) + bout_ref[...]
    col = jax.lax.broadcasted_iota(jnp.int32, (Bp, Op), 1)
    logits = jnp.where(col < o_valid, logits, jnp.float32(-1e30))
    m = jnp.max(logits, axis=-1, keepdims=True)
    shifted = logits - m
    lse = jnp.log(jnp.sum(jnp.exp(shifted), axis=-1, keepdims=True))
    logp_ref[...] = (shifted - lse).astype(logp_ref.dtype)


def init_params(key, hidden_size, output_size):
    """PyTorch-shaped raw weights + padded/fused bf16 kernel layouts."""
    H, O = hidden_size, output_size
    Hp = _round_up(H, _LANE)
    Op = _round_up(O, _LANE)

    ks = jax.random.split(key, 6)
    scale = 1.0 / jnp.sqrt(H)
    emb = jax.random.normal(ks[0], (O, H), jnp.float32)
    w_ih = jax.random.uniform(ks[1], (3 * H, H), jnp.float32, -scale, scale)
    w_hh = jax.random.uniform(ks[2], (3 * H, H), jnp.float32, -scale, scale)
    b_ih = jax.random.uniform(ks[3], (3 * H,), jnp.float32, -scale, scale)
    b_hh = jax.random.uniform(ks[4], (3 * H,), jnp.float32, -scale, scale)
    w_out = jax.random.uniform(ks[5], (O, H), jnp.float32, -scale, scale)
    b_out = jnp.zeros((O,), jnp.float32)

    raw = dict(embedding=emb, w_ih=w_ih, w_hh=w_hh, b_ih=b_ih, b_hh=b_hh,
               w_out=w_out, b_out=b_out)

    # Per-gate [H, H] blocks, transposed so the kernel computes x @ W.
    w_ir, w_iz, w_in = (w_ih[g * H:(g + 1) * H].T for g in range(3))
    w_hr, w_hz, w_hn = (w_hh[g * H:(g + 1) * H].T for g in range(3))
    zeros = jnp.zeros((Hp, Hp), jnp.float32)
    x_rows = jnp.concatenate([_pad2d(w_ir, Hp, Hp), _pad2d(w_iz, Hp, Hp),
                              _pad2d(w_in, Hp, Hp), zeros], axis=1)
    h_rows = jnp.concatenate([_pad2d(w_hr, Hp, Hp), _pad2d(w_hz, Hp, Hp),
                              zeros, _pad2d(w_hn, Hp, Hp)], axis=1)
    w_gates = jnp.concatenate([x_rows, h_rows], axis=0).astype(jnp.bfloat16)

    def pad1(v):
        return jnp.pad(v, (0, Hp - H))

    # r/z biases can be folded; b_in and b_hn stay in their own column blocks.
    b_gates = jnp.concatenate([
        pad1(b_ih[0:H] + b_hh[0:H]),          # r
        pad1(b_ih[H:2 * H] + b_hh[H:2 * H]),  # z
        pad1(b_ih[2 * H:3 * H]),              # n (input part)
        pad1(b_hh[2 * H:3 * H]),              # n (hidden part)
    ])[None, :].astype(jnp.float32)           # [1, 4*Hp]

    return {
        "hidden_size": H,
        "output_size": O,
        "emb_p": _pad2d(emb, Op, Hp).astype(jnp.bfloat16),       # [Op, Hp]
        "w_gates": w_gates,                                      # [2Hp, 4Hp]
        "b_gates": b_gates,                                      # [1, 4Hp]
        "w_out_p": _pad2d(w_out.T, Hp, Op).astype(jnp.bfloat16),  # [Hp, Op]
        "b_out_p": jnp.pad(b_out, (0, Op - O))[None, :],          # [1, Op]
        "raw": raw,
    }


def decoder_rnn_forward(params, input_seq, hidden=None):
    """Pallas equivalent of DecoderRNN.forward (n_layers == 1).

    input_seq: int [batch, 1] token ids
    hidden:    optional f32 [1, batch, hidden]
    returns:   (log_probs [batch, output_size], hidden [1, batch, hidden])
    """
    H = params["hidden_size"]
    O = params["output_size"]
    Hp, Op = params["w_out_p"].shape
    B = input_seq.shape[0]
    Bp = _round_up(max(B, 1), _SUBLANE)

    if hidden is None:
        hidden = jnp.zeros((1, B, H), dtype=jnp.float32)

    tok = input_seq[:, 0].astype(jnp.int32)
    tok_p = jnp.zeros((Bp, 1), jnp.int32).at[:B, 0].set(tok)
    h0_p = jnp.zeros((Bp, Hp), jnp.float32).at[:B, :H].set(hidden[0])

    kernel = functools.partial(_decoder_step_kernel, o_valid=O)
    vmem = lambda: pl.BlockSpec(memory_space=pltpu.MemorySpace.VMEM)

    logp_p, hnew_p = pl.pallas_call(
        kernel,
        out_shape=(jax.ShapeDtypeStruct((Bp, Op), jnp.float32),
                   jax.ShapeDtypeStruct((Bp, Hp), jnp.float32)),
        in_specs=[vmem() for _ in range(7)],
        out_specs=(vmem(), vmem()),
    )(tok_p, h0_p, params["emb_p"], params["w_gates"], params["b_gates"],
      params["w_out_p"], params["b_out_p"])

    return logp_p[:B, :O], hnew_p[None, :B, :H]


def _reference_forward(raw, input_seq, hidden, H, O):
    """Pure-JAX f32 reference matching the PyTorch module."""
    x = jnp.maximum(raw["embedding"][input_seq[:, 0]], 0.0)
    h = hidden[0]
    gi = x @ raw["w_ih"].T + raw["b_ih"]
    gh = h @ raw["w_hh"].T + raw["b_hh"]
    i_r, i_z, i_n = gi[:, :H], gi[:, H:2 * H], gi[:, 2 * H:]
    h_r, h_z, h_n = gh[:, :H], gh[:, H:2 * H], gh[:, 2 * H:]
    r = jax.nn.sigmoid(i_r + h_r)
    z = jax.nn.sigmoid(i_z + h_z)
    n = jnp.tanh(i_n + r * h_n)
    h_new = (1.0 - z) * n + z * h
    logits = h_new @ raw["w_out"].T + raw["b_out"]
    return jax.nn.log_softmax(logits, axis=-1), h_new[None]


if __name__ == "__main__":
    hidden_size = 32
    output_size = 16     # vocab size
    batch_size = 2
    n_layers = 1

    key = jax.random.PRNGKey(0)
    pkey, ikey = jax.random.split(key)
    params = init_params(pkey, hidden_size, output_size)

    input_seq = jax.random.randint(ikey, (batch_size, 1), 0, output_size,
                                   dtype=jnp.int32)

    log_probs, hidden = decoder_rnn_forward(params, input_seq, hidden=None)
    jax.block_until_ready((log_probs, hidden))

    assert log_probs.shape == (batch_size, output_size)
    assert hidden.shape == (n_layers, batch_size, hidden_size)
    # log-softmax rows must exponentiate-sum to ~1 (no leakage into padding)
    assert jnp.allclose(jnp.sum(jnp.exp(log_probs), axis=1), 1.0, atol=1e-5)

    # correctness vs. pure-f32 reference (bf16 weights => loose tolerance)
    ref_lp, ref_h = _reference_forward(
        params["raw"], input_seq,
        jnp.zeros((1, batch_size, hidden_size), jnp.float32),
        hidden_size, output_size)
    assert jnp.allclose(log_probs, ref_lp, atol=5e-2), \
        float(jnp.max(jnp.abs(log_probs - ref_lp)))
    assert jnp.allclose(hidden, ref_h, atol=5e-2)

    print("KERNEL_OK")
</pallas_src>

<mosaic_0001>
module attributes {stable_mosaic.version = 11 : i64} {
  func.func @_decoder_step_kernel(%arg0: memref<8x1xi32, #tpu.memory_space<vmem>>, %arg1: memref<8x128xf32, #tpu.memory_space<vmem>>, %arg2: memref<128x128xbf16, #tpu.memory_space<vmem>>, %arg3: memref<256x512xbf16, #tpu.memory_space<vmem>>, %arg4: memref<1x512xf32, #tpu.memory_space<vmem>>, %arg5: memref<128x128xbf16, #tpu.memory_space<vmem>>, %arg6: memref<1x128xf32, #tpu.memory_space<vmem>>, %arg7: memref<8x128xf32, #tpu.memory_space<vmem>>, %arg8: memref<8x128xf32, #tpu.memory_space<vmem>>) attributes {dimension_semantics = [], scalar_prefetch = 0 : i64, scratch_operands = 0 : i64, tpu.core_type = #tpu.core_type<tc>} {
    %c0 = arith.constant 0 : index
    %c0_0 = arith.constant 0 : index
    %0 = vector.load %arg0[%c0, %c0_0] : memref<8x1xi32, #tpu.memory_space<vmem>>, vector<8x1xi32>
    %1 = tpu.iota {dimensions = array<i32: 1>} : vector<8x128xi32>
    %2 = vector.broadcast %0 : vector<8x1xi32> to vector<8x128xi32>
    %3 = arith.cmpi eq, %1, %2 : vector<8x128xi32>
    %cst = arith.constant 1.000000e+00 : f32
    %cst_1 = arith.constant 0.000000e+00 : f32
    %4 = vector.broadcast %cst : f32 to vector<8x128xf32>
    %5 = vector.broadcast %cst_1 : f32 to vector<8x128xf32>
    %6 = arith.select %3, %4, %5 : vector<8x128xi1>, vector<8x128xf32>
    %7 = arith.truncf %6 : vector<8x128xf32> to vector<8x128xbf16>
    %c0_2 = arith.constant 0 : index
    %c0_3 = arith.constant 0 : index
    %8 = vector.load %arg2[%c0_2, %c0_3] : memref<128x128xbf16, #tpu.memory_space<vmem>>, vector<128x128xbf16>
    %cst_4 = arith.constant dense<0.000000e+00> : vector<8x128xf32>
    %9 = tpu.matmul %7, %8, %cst_4 {dimension_numbers = #tpu.dot_dimension_numbers<[1], [0], [0], [1], [0, 0, 1, 1], [], []>} : vector<8x128xbf16>, vector<128x128xbf16>, vector<8x128xf32> -> vector<8x128xf32>
    %cst_5 = arith.constant 0.000000e+00 : f32
    %10 = vector.broadcast %cst_5 : f32 to vector<8x128xf32>
    %11 = arith.maximumf %9, %10 : vector<8x128xf32>
    %c0_6 = arith.constant 0 : index
    %c0_7 = arith.constant 0 : index
    %12 = vector.load %arg1[%c0_6, %c0_7] : memref<8x128xf32, #tpu.memory_space<vmem>>, vector<8x128xf32>
    %13 = tpu.concatenate %11, %12 in 1 : vector<8x128xf32>, vector<8x128xf32> -> vector<8x256xf32>
    %14 = arith.truncf %13 : vector<8x256xf32> to vector<8x256xbf16>
    %c0_8 = arith.constant 0 : index
    %c0_9 = arith.constant 0 : index
    %15 = vector.load %arg3[%c0_8, %c0_9] : memref<256x512xbf16, #tpu.memory_space<vmem>>, vector<256x512xbf16>
    %cst_10 = arith.constant dense<0.000000e+00> : vector<8x512xf32>
    %16 = tpu.matmul %14, %15, %cst_10 {dimension_numbers = #tpu.dot_dimension_numbers<[1], [0], [0], [1], [0, 0, 1, 1], [], []>} : vector<8x256xbf16>, vector<256x512xbf16>, vector<8x512xf32> -> vector<8x512xf32>
    %c0_11 = arith.constant 0 : index
    %c0_12 = arith.constant 0 : index
    %17 = vector.load %arg4[%c0_11, %c0_12] : memref<1x512xf32, #tpu.memory_space<vmem>>, vector<1x512xf32>
    %18 = vector.broadcast %17 : vector<1x512xf32> to vector<8x512xf32>
    %19 = arith.addf %16, %18 : vector<8x512xf32>
    %20 = vector.extract_strided_slice %19 {offsets = [0, 0], sizes = [8, 128], strides = [1, 1]} : vector<8x512xf32> to vector<8x128xf32>
    %21 = arith.negf %20 : vector<8x128xf32>
    %22 = math.exp %21 : vector<8x128xf32>
    %cst_13 = arith.constant 1.000000e+00 : f32
    %23 = vector.broadcast %cst_13 : f32 to vector<8x128xf32>
    %24 = arith.addf %23, %22 : vector<8x128xf32>
    %25 = arith.divf %23, %24 : vector<8x128xf32>
    %26 = vector.extract_strided_slice %19 {offsets = [0, 128], sizes = [8, 128], strides = [1, 1]} : vector<8x512xf32> to vector<8x128xf32>
    %27 = arith.negf %26 : vector<8x128xf32>
    %28 = math.exp %27 : vector<8x128xf32>
    %cst_14 = arith.constant 1.000000e+00 : f32
    %29 = vector.broadcast %cst_14 : f32 to vector<8x128xf32>
    %30 = arith.addf %29, %28 : vector<8x128xf32>
    %31 = arith.divf %29, %30 : vector<8x128xf32>
    %32 = vector.extract_strided_slice %19 {offsets = [0, 256], sizes = [8, 128], strides = [1, 1]} : vector<8x512xf32> to vector<8x128xf32>
    %33 = vector.extract_strided_slice %19 {offsets = [0, 384], sizes = [8, 128], strides = [1, 1]} : vector<8x512xf32> to vector<8x128xf32>
    %34 = arith.mulf %25, %33 : vector<8x128xf32>
    %35 = arith.addf %32, %34 : vector<8x128xf32>
    %36 = math.tanh %35 : vector<8x128xf32>
    %cst_15 = arith.constant 1.000000e+00 : f32
    %37 = vector.broadcast %cst_15 : f32 to vector<8x128xf32>
    %38 = arith.subf %37, %31 : vector<8x128xf32>
    %39 = arith.mulf %38, %36 : vector<8x128xf32>
    %40 = arith.mulf %31, %12 : vector<8x128xf32>
    %41 = arith.addf %39, %40 : vector<8x128xf32>
    %c0_16 = arith.constant 0 : index
    %c0_17 = arith.constant 0 : index
    %42 = vector.load %arg8[%c0_16, %c0_17] : memref<8x128xf32, #tpu.memory_space<vmem>>, vector<8x128xf32>
    tpu.vector_store %arg8[%c0_16, %c0_17], %41 {strides = array<i32>} : memref<8x128xf32, #tpu.memory_space<vmem>>, vector<8x128xf32>,
    %43 = arith.truncf %41 : vector<8x128xf32> to vector<8x128xbf16>
    %c0_18 = arith.constant 0 : index
    %c0_19 = arith.constant 0 : index
    %44 = vector.load %arg5[%c0_18, %c0_19] : memref<128x128xbf16, #tpu.memory_space<vmem>>, vector<128x128xbf16>
    %cst_20 = arith.constant dense<0.000000e+00> : vector<8x128xf32>
    %45 = tpu.matmul %43, %44, %cst_20 {dimension_numbers = #tpu.dot_dimension_numbers<[1], [0], [0], [1], [0, 0, 1, 1], [], []>} : vector<8x128xbf16>, vector<128x128xbf16>, vector<8x128xf32> -> vector<8x128xf32>
    %c0_21 = arith.constant 0 : index
    %c0_22 = arith.constant 0 : index
    %46 = vector.load %arg6[%c0_21, %c0_22] : memref<1x128xf32, #tpu.memory_space<vmem>>, vector<1x128xf32>
    %47 = vector.broadcast %46 : vector<1x128xf32> to vector<8x128xf32>
    %48 = arith.addf %45, %47 : vector<8x128xf32>
    %49 = tpu.iota {dimensions = array<i32: 1>} : vector<8x128xi32>
    %c16_i32 = arith.constant 16 : i32
    %50 = vector.broadcast %c16_i32 : i32 to vector<8x128xi32>
    %51 = arith.cmpi slt, %49, %50 : vector<8x128xi32>
    %cst_23 = arith.constant -1.000000e+30 : f32
    %52 = vector.broadcast %cst_23 : f32 to vector<8x128xf32>
    %53 = arith.select %51, %48, %52 : vector<8x128xi1>, vector<8x128xf32>
    %cst_24 = arith.constant dense<0xFF800000> : vector<8xf32>
    %54 = vector.multi_reduction <maximumf>, %53, %cst_24 [1] : vector<8x128xf32> to vector<8xf32>
    %55 = vector.shape_cast %54 : vector<8xf32> to vector<8x1xf32>
    %56 = vector.broadcast %55 : vector<8x1xf32> to vector<8x128xf32>
    %57 = arith.subf %53, %56 : vector<8x128xf32>
    %58 = math.exp %57 : vector<8x128xf32>
    %cst_25 = arith.constant dense<0.000000e+00> : vector<8xf32>
    %59 = vector.multi_reduction <add>, %58, %cst_25 [1] : vector<8x128xf32> to vector<8xf32>
    %60 = vector.shape_cast %59 : vector<8xf32> to vector<8x1xf32>
    %61 = math.log %60 : vector<8x1xf32>
    %62 = vector.broadcast %61 : vector<8x1xf32> to vector<8x128xf32>
    %63 = arith.subf %57, %62 : vector<8x128xf32>
    %c0_26 = arith.constant 0 : index
    %c0_27 = arith.constant 0 : index
    %64 = vector.load %arg7[%c0_26, %c0_27] : memref<8x128xf32, #tpu.memory_space<vmem>>, vector<8x128xf32>
    tpu.vector_store %arg7[%c0_26, %c0_27], %63 {strides = array<i32>} : memref<8x128xf32, #tpu.memory_space<vmem>>, vector<8x128xf32>,
    return
  }
}

</mosaic_0001>

<llo_original>
// kernel: tpu_custom_call.1
$region0: #{tpu_custom_call.1}
  #allocation0 [shape = 'u32[]', space=smem, size = 0x4, offset = 0x4, fixed_abs, tag = 'smem constant byte address 0x4 - core index']
  #allocation1 [shape = 'u32[144,128]{1,0:T(1,128)}', space=vmem, size = 0x12000, scoped, tag = 'internal scratch']
  %s0 = inlined_call_operand.vmem [shape: s32[8,1], index: 0, kind: input, shape index: {}]
  %s1 = inlined_call_operand.vmem [shape: f32[8,128], index: 1, kind: input, shape index: {}]
  %s2 = inlined_call_operand.hbm [shape: bf16[128,128], index: 2, kind: input, shape index: {}]
  %s3 = inlined_call_operand.hbm [shape: bf16[256,512], index: 3, kind: input, shape index: {}]
  %s4 = inlined_call_operand.vmem [shape: f32[1,512], index: 4, kind: input, shape index: {}]
  %s5 = inlined_call_operand.hbm [shape: bf16[128,128], index: 5, kind: input, shape index: {}]
  %s6 = inlined_call_operand.vmem [shape: f32[1,128], index: 6, kind: input, shape index: {}]
  %s7 = inlined_call_operand.hbm [shape: f32[8,128], index: 7, kind: output, shape index: {0}]
  %s8 = inlined_call_operand.hbm [shape: f32[8,128], index: 8, kind: output, shape index: {1}]
  %9 = xla_tuple %s7, %s8
  %s10 = sld [smem:[#allocation0]]
  $region58: #{tpu_custom_call.1} parent=0
    _
  %s12 = ssub.s32 1, %s10
  %s13 = scalar_select 0, %s12, %s10
  $region1: #{tpu_custom_call.1} parent=0
    #allocation2 [shape = 'u8[32768]{0}', space=vmem, size = 0x8000, scoped, tag = 'input window, operand 2, single buffered']
    #allocation3 [shape = 's32[1]{0}', space=sflag, size = 0x4, scoped, tag = 'scoped memory for tpu_custom_call.1']
    #allocation4 [shape = 's32[1]{0}', space=sflag, size = 0x4, scoped, tag = 'scoped memory for tpu_custom_call.1']
    #allocation5 [shape = 'u8[262144]{0}', space=vmem, size = 0x40000, scoped, tag = 'input window, operand 3, single buffered']
    #allocation6 [shape = 's32[1]{0}', space=sflag, size = 0x4, scoped, tag = 'scoped memory for tpu_custom_call.1']
    #allocation7 [shape = 'u8[32768]{0}', space=vmem, size = 0x8000, scoped, tag = 'input window, operand 5, single buffered']
    #allocation8 [shape = 'u8[4096]{0}', space=vmem, size = 0x1000, scoped, tag = 'output window, operand 0, single buffered']
    #allocation9 [shape = 'u8[4096]{0}', space=vmem, size = 0x1000, scoped, tag = 'output window, operand 1, single buffered']
    #allocation10 [shape = 's32[1]{0}', space=sflag, size = 0x4, scoped, tag = 'scoped memory for tpu_custom_call.1']
    %14 = vsyncpa [#allocation3], 0
    %15 = vsyncpa [#allocation6], 0
    %16 = vsyncpa [#allocation4], 0
    %17 = vsyncpa [#allocation10], 0
    // Predicated region
    $region2: #{tpu_custom_call.1} parent=1 // pred_check
      _
    $region3: #{tpu_custom_call.1} parent=1 // pred_check_branch
      %19 = sbr.rel (0) target = $region5
    $region4: #{tpu_custom_call.1} parent=1 // pred_region
      _
    $region5: #{tpu_custom_call.1} parent=1 // pred_fallthru
      _
    // Predicated region
    $region6: #{tpu_custom_call.1} parent=1 // pred_check
      _
    $region7: #{tpu_custom_call.1} parent=1 // pred_check_branch
      %21 = sbr.rel (0) target = $region9
    $region8: #{tpu_custom_call.1} parent=1 // pred_region
      _
    $region9: #{tpu_custom_call.1} parent=1 // pred_fallthru
      _
    // Predicated region
    $region10: #{tpu_custom_call.1} parent=1 // pred_check
      _
    $region11: #{tpu_custom_call.1} parent=1 // pred_check_branch
      %23 = sbr.rel (0) target = $region13
    $region12: #{tpu_custom_call.1} parent=1 // pred_region
      %s25 = ssub.s32 1024, 1024
      %26 = vsyncadd [#allocation3], %s25
      %s27 = sshll.u32 [#allocation2], 4
      %s28 = int_to_ptr.vmem [resolvable:$true] %s27
      %33 = dma.hbm_to_vmem [thread:$0]  %s2, 1024, %s28, [#allocation3], 64, 64, 4
    $region13: #{tpu_custom_call.1} parent=1 // pred_fallthru
      _
    // Predicated region
    $region14: #{tpu_custom_call.1} parent=1 // pred_check
      _
    $region15: #{tpu_custom_call.1} parent=1 // pred_check_branch
      %35 = sbr.rel (0) target = $region17
    $region16: #{tpu_custom_call.1} parent=1 // pred_region
      %s37 = ssub.s32 8192, 8192
      %38 = vsyncadd [#allocation6], %s37
      %s39 = sshll.u32 [#allocation5], 4
      %s40 = int_to_ptr.vmem [resolvable:$true] %s39
      %45 = dma.hbm_to_vmem [thread:$0]  %s3, 8192, %s40, [#allocation6], 256, 256, 16
    $region17: #{tpu_custom_call.1} parent=1 // pred_fallthru
      _
    // Predicated region
    $region18: #{tpu_custom_call.1} parent=1 // pred_check
      _
    $region19: #{tpu_custom_call.1} parent=1 // pred_check_branch
      %47 = sbr.rel (0) target = $region21
    $region20: #{tpu_custom_call.1} parent=1 // pred_region
      _
    $region21: #{tpu_custom_call.1} parent=1 // pred_fallthru
      _
    // Predicated region
    $region22: #{tpu_custom_call.1} parent=1 // pred_check
      _
    $region23: #{tpu_custom_call.1} parent=1 // pred_check_branch
      %49 = sbr.rel (0) target = $region25
    $region24: #{tpu_custom_call.1} parent=1 // pred_region
      %s51 = ssub.s32 1024, 1024
      %52 = vsyncadd [#allocation6], %s51
      %s53 = sshll.u32 [#allocation7], 4
      %s54 = int_to_ptr.vmem [resolvable:$true] %s53
      %59 = dma.hbm_to_vmem [thread:$0]  %s5, 1024, %s54, [#allocation6], 64, 64, 4
    $region25: #{tpu_custom_call.1} parent=1 // pred_fallthru
      _
    // Predicated region
    $region26: #{tpu_custom_call.1} parent=1 // pred_check
      _
    $region27: #{tpu_custom_call.1} parent=1 // pred_check_branch
      %61 = sbr.rel (0) target = $region29
    $region28: #{tpu_custom_call.1} parent=1 // pred_region
      _
    $region29: #{tpu_custom_call.1} parent=1 // pred_fallthru
      _
    // Predicated region
    $region30: #{tpu_custom_call.1} parent=1 // pred_check
      _
    $region31: #{tpu_custom_call.1} parent=1 // pred_check_branch
      %63 = sbr.rel (0) target = $region33
    $region32: #{tpu_custom_call.1} parent=1 // pred_region
      %64 = dma.done [#allocation3], 1024
    $region33: #{tpu_custom_call.1} parent=1 // pred_fallthru
      _
    // Predicated region
    $region34: #{tpu_custom_call.1} parent=1 // pred_check
      _
    $region35: #{tpu_custom_call.1} parent=1 // pred_check_branch
      %66 = sbr.rel (0) target = $region37
    $region36: #{tpu_custom_call.1} parent=1 // pred_region
      %67 = dma.done [#allocation6], 8192
    $region37: #{tpu_custom_call.1} parent=1 // pred_fallthru
      _
    // Predicated region
    $region38: #{tpu_custom_call.1} parent=1 // pred_check
      _
    $region39: #{tpu_custom_call.1} parent=1 // pred_check_branch
      %69 = sbr.rel (0) target = $region41
    $region40: #{tpu_custom_call.1} parent=1 // pred_region
      %70 = dma.done [#allocation6], 1024
    $region41: #{tpu_custom_call.1} parent=1 // pred_fallthru
      _
    %v72 = vld [vmem:[%s0] sm:$0xff]
    %v73 = vlaneseq
    %v74 = vand.u32 %v73, 127
    %75 = vset.pattern.permute.xlu0 0
    %76 = vperm.xlu0 %75, %v72
    %v77 = vpop.permute.xlu0 %76
    %vm78 = vcmp.eq.s32.totalorder %v74, %v77
    %v79 = vsel %vm78, 1.0, 0.0
    %v80 = vpack.c.bf16 %v79, %v79
    %v81 = vld [vmem:[#allocation2] sm:$0xf]
    %v82 = vld [vmem:[#allocation2 + $0x4] sm:$0xf]
    %v83 = vld [vmem:[#allocation2 + $0x8] sm:$0xf]
    %v84 = vld [vmem:[#allocation2 + $0xc] sm:$0xf]
    %v85 = vld [vmem:[#allocation2 + $0x10] sm:$0xf]
    %v86 = vld [vmem:[#allocation2 + $0x14] sm:$0xf]
    %v87 = vld [vmem:[#allocation2 + $0x18] sm:$0xf]
    %v88 = vld [vmem:[#allocation2 + $0x1c] sm:$0xf]
    %v89 = vld [vmem:[#allocation2 + $0x20] sm:$0xf]
    %v90 = vld [vmem:[#allocation2 + $0x24] sm:$0xf]
    %v91 = vld [vmem:[#allocation2 + $0x28] sm:$0xf]
    %v92 = vld [vmem:[#allocation2 + $0x2c] sm:$0xf]
    %v93 = vld [vmem:[#allocation2 + $0x30] sm:$0xf]
    %v94 = vld [vmem:[#allocation2 + $0x34] sm:$0xf]
    %v95 = vld [vmem:[#allocation2 + $0x38] sm:$0xf]
    %v96 = vld [vmem:[#allocation2 + $0x3c] sm:$0xf]
    %v113 = vunpack.c.l.b16 %v81
    %v114 = vunpack.c.l.b16 %v82
    %v115 = vunpack.c.l.b16 %v83
    %v116 = vunpack.c.l.b16 %v84
    %v117 = vunpack.c.l.b16 %v85
    %v118 = vunpack.c.l.b16 %v86
    %v119 = vunpack.c.l.b16 %v87
    %v120 = vunpack.c.l.b16 %v88
    %v121 = vunpack.c.l.b16 %v89
    %v122 = vunpack.c.l.b16 %v90
    %v123 = vunpack.c.l.b16 %v91
    %v124 = vunpack.c.l.b16 %v92
    %v125 = vunpack.c.l.b16 %v93
    %v126 = vunpack.c.l.b16 %v94
    %v127 = vunpack.c.l.b16 %v95
    %v128 = vunpack.c.l.b16 %v96
    %v129 = vpack.c.b16 %v114, %v113
    %v130 = vpack.c.b16 %v116, %v115
    %v131 = vpack.c.b16 %v118, %v117
    %v132 = vpack.c.b16 %v120, %v119
    %v133 = vpack.c.b16 %v122, %v121
    %v134 = vpack.c.b16 %v124, %v123
    %v135 = vpack.c.b16 %v126, %v125
    %v136 = vpack.c.b16 %v128, %v127
    %145 = vmatprep.subr.bf16.mxu0 0
    %146 = vmatpush1.bf16.msra.mxu0 %v136
    %147 = vmatprep.subr.bf16.mxu0 0
    %148 = vmatpush1.bf16.msra.mxu0 %v135
    %149 = vmatprep.subr.bf16.mxu0 0
    %150 = vmatpush1.bf16.msra.mxu0 %v134
    %151 = vmatprep.subr.bf16.mxu0 0
    %152 = vmatpush1.bf16.msra.mxu0 %v133
    %153 = vmatprep.subr.bf16.mxu0 0
    %154 = vmatpush1.bf16.msra.mxu0 %v132
    %155 = vmatprep.subr.bf16.mxu0 0
    %156 = vmatpush1.bf16.msra.mxu0 %v131
    %157 = vmatprep.subr.bf16.mxu0 0
    %158 = vmatpush1.bf16.msra.mxu0 %v130
    %159 = vmatprep.subr.bf16.mxu0 0
    %160 = vmatpush1.bf16.msra.mxu0 %v129
    %161 = vmatprep.subr.bf16.mxu0 0
    %162 = vmatpush2.bf16.msra.mxu0 0
    %163 = vmatprep.subr.bf16.mxu0 0
    %164 = vmatpush2.bf16.msra.mxu0 0
    %165 = vmatprep.subr.bf16.mxu0 0
    %166 = vmatpush2.bf16.msra.mxu0 0
    %167 = vmatprep.subr.bf16.mxu0 0
    %168 = vmatpush2.bf16.msra.mxu0 0
    %169 = vmatprep.subr.bf16.mxu0 0
    %170 = vmatpush2.bf16.msra.mxu0 0
    %171 = vmatprep.subr.bf16.mxu0 0
    %172 = vmatpush2.bf16.msra.mxu0 0
    %173 = vmatprep.subr.bf16.mxu0 0
    %174 = vmatpush2.bf16.msra.mxu0 0
    %175 = vmatprep.subr.bf16.mxu0 0
    %176 = vmatpush2.bf16.msra.mxu0 0
    %177 = vmatprep.mubr.bf16.mxu0 0
    %178 = vmatmul.mubr.bf16.gmra.mxu0 %v80
    %v179 = vpop.f32.mrf.mxu0
    %v180 = vadd.f32 0.0, %v179
    %v181 = vpop.f32.mrf.mxu0
    %v182 = vpop.f32.mrf.mxu0
    %v183 = vpop.f32.mrf.mxu0
    %184 = vdwg.mxu0
    %v185 = vmax.f32 %v180, 0.0
    %v186 = vld [vmem:[%s1] sm:$0xff]
    %v187 = vpack.c.bf16 %v185, %v185
    %v188 = vpack.c.bf16 %v186, %v186
    %v189 = vld [vmem:[#allocation5] sm:$0xff]
    %v190 = vld [vmem:[#allocation5 + $0x8] sm:$0xff]
    %v191 = vld [vmem:[#allocation5 + $0x10] sm:$0xff]
    %v192 = vld [vmem:[#allocation5 + $0x18] sm:$0xff]
    %v193 = vld [vmem:[#allocation5 + $0x20] sm:$0xff]
    %v194 = vld [vmem:[#allocation5 + $0x28] sm:$0xff]
    %v195 = vld [vmem:[#allocation5 + $0x30] sm:$0xff]
    %v196 = vld [vmem:[#allocation5 + $0x38] sm:$0xff]
    %v197 = vld [vmem:[#allocation5 + $0x40] sm:$0xff]
    %v198 = vld [vmem:[#allocation5 + $0x48] sm:$0xff]
    %v199 = vld [vmem:[#allocation5 + $0x50] sm:$0xff]
    %v200 = vld [vmem:[#allocation5 + $0x58] sm:$0xff]
    %v201 = vld [vmem:[#allocation5 + $0x60] sm:$0xff]
    %v202 = vld [vmem:[#allocation5 + $0x68] sm:$0xff]
    %v203 = vld [vmem:[#allocation5 + $0x70] sm:$0xff]
    %v204 = vld [vmem:[#allocation5 + $0x78] sm:$0xff]
    %v205 = vld [vmem:[#allocation5 + $0x80] sm:$0xff]
    %v206 = vld [vmem:[#allocation5 + $0x88] sm:$0xff]
    %v207 = vld [vmem:[#allocation5 + $0x90] sm:$0xff]
    %v208 = vld [vmem:[#allocation5 + $0x98] sm:$0xff]
    %v209 = vld [vmem:[#allocation5 + $0xa0] sm:$0xff]
    %v210 = vld [vmem:[#allocation5 + $0xa8] sm:$0xff]
    %v211 = vld [vmem:[#allocation5 + $0xb0] sm:$0xff]
    %v212 = vld [vmem:[#allocation5 + $0xb8] sm:$0xff]
    %v213 = vld [vmem:[#allocation5 + $0xc0] sm:$0xff]
    %v214 = vld [vmem:[#allocation5 + $0xc8] sm:$0xff]
    %v215 = vld [vmem:[#allocation5 + $0xd0] sm:$0xff]
    %v216 = vld [vmem:[#allocation5 + $0xd8] sm:$0xff]
    %v217 = vld [vmem:[#allocation5 + $0xe0] sm:$0xff]
    %v218 = vld [vmem:[#allocation5 + $0xe8] sm:$0xff]
    %v219 = vld [vmem:[#allocation5 + $0xf0] sm:$0xff]
    %v220 = vld [vmem:[#allocation5 + $0xf8] sm:$0xff]
    %v221 = vld [vmem:[#allocation5 + $0x100] sm:$0xff]
    %v222 = vld [vmem:[#allocation5 + $0x108] sm:$0xff]
    %v223 = vld [vmem:[#allocation5 + $0x110] sm:$0xff]
    %v224 = vld [vmem:[#allocation5 + $0x118] sm:$0xff]
    %v225 = vld [vmem:[#allocation5 + $0x120] sm:$0xff]
    %v226 = vld [vmem:[#allocation5 + $0x128] sm:$0xff]
    %v227 = vld [vmem:[#allocation5 + $0x130] sm:$0xff]
    %v228 = vld [vmem:[#allocation5 + $0x138] sm:$0xff]
    %v229 = vld [vmem:[#allocation5 + $0x140] sm:$0xff]
    %v230 = vld [vmem:[#allocation5 + $0x148] sm:$0xff]
    %v231 = vld [vmem:[#allocation5 + $0x150] sm:$0xff]
    %v232 = vld [vmem:[#allocation5 + $0x158] sm:$0xff]
    %v233 = vld [vmem:[#allocation5 + $0x160] sm:$0xff]
    %v234 = vld [vmem:[#allocation5 + $0x168] sm:$0xff]
    %v235 = vld [vmem:[#allocation5 + $0x170] sm:$0xff]
    %v236 = vld [vmem:[#allocation5 + $0x178] sm:$0xff]
    %v237 = vld [vmem:[#allocation5 + $0x180] sm:$0xff]
    %v238 = vld [vmem:[#allocation5 + $0x188] sm:$0xff]
    %v239 = vld [vmem:[#allocation5 + $0x190] sm:$0xff]
    %v240 = vld [vmem:[#allocation5 + $0x198] sm:$0xff]
    %v241 = vld [vmem:[#allocation5 + $0x1a0] sm:$0xff]
    %v242 = vld [vmem:[#allocation5 + $0x1a8] sm:$0xff]
    %v243 = vld [vmem:[#allocation5 + $0x1b0] sm:$0xff]
    %v244 = vld [vmem:[#allocation5 + $0x1b8] sm:$0xff]
    %v245 = vld [vmem:[#allocation5 + $0x1c0] sm:$0xff]
    %v246 = vld [vmem:[#allocation5 + $0x1c8] sm:$0xff]
    %v247 = vld [vmem:[#allocation5 + $0x1d0] sm:$0xff]
    %v248 = vld [vmem:[#allocation5 + $0x1d8] sm:$0xff]
    %v249 = vld [vmem:[#allocation5 + $0x1e0] sm:$0xff]
    %v250 = vld [vmem:[#allocation5 + $0x1e8] sm:$0xff]
    %v251 = vld [vmem:[#allocation5 + $0x1f0] sm:$0xff]
    %v252 = vld [vmem:[#allocation5 + $0x1f8] sm:$0xff]
    %v253 = vld [vmem:[%s4] sm:$0xf]
    %v255 = vlaneseq
    %v256 = vshrl.u32 %v255, 7
    %v257 = vsub.s32 0, %v256
    %v258 = vrot.slane %v253, %v257
    %v259 = vlaneseq
    %v260 = vshrl.u32 %v259, 7
    %v261 = vsub.s32 1, %v260
    %v262 = vrot.slane %v253, %v261
    %v263 = vlaneseq
    %v264 = vshrl.u32 %v263, 7
    %v265 = vsub.s32 2, %v264
    %v266 = vrot.slane %v253, %v265
    %v267 = vlaneseq
    %v268 = vshrl.u32 %v267, 7
    %v269 = vsub.s32 3, %v268
    %v270 = vrot.slane %v253, %v269
    %v339 = vunpack.c.l.b16 %v189
    %v340 = vunpack.c.h.b16 %v189
    %v341 = vunpack.c.l.b16 %v190
    %v342 = vunpack.c.h.b16 %v190
    %v343 = vunpack.c.l.b16 %v191
    %v344 = vunpack.c.h.b16 %v191
    %v345 = vunpack.c.l.b16 %v192
    %v346 = vunpack.c.h.b16 %v192
    %v347 = vunpack.c.l.b16 %v193
    %v348 = vunpack.c.h.b16 %v193
    %v349 = vunpack.c.l.b16 %v194
    %v350 = vunpack.c.h.b16 %v194
    %v351 = vunpack.c.l.b16 %v195
    %v352 = vunpack.c.h.b16 %v195
    %v353 = vunpack.c.l.b16 %v196
    %v354 = vunpack.c.h.b16 %v196
    %v355 = vunpack.c.l.b16 %v197
    %v356 = vunpack.c.h.b16 %v197
    %v357 = vunpack.c.l.b16 %v198
    %v358 = vunpack.c.h.b16 %v198
    %v359 = vunpack.c.l.b16 %v199
    %v360 = vunpack.c.h.b16 %v199
    %v361 = vunpack.c.l.b16 %v200
    %v362 = vunpack.c.h.b16 %v200
    %v363 = vunpack.c.l.b16 %v201
    %v364 = vunpack.c.h.b16 %v201
    %v365 = vunpack.c.l.b16 %v202
    %v366 = vunpack.c.h.b16 %v202
    %v367 = vunpack.c.l.b16 %v203
    %v368 = vunpack.c.h.b16 %v203
    %v369 = vunpack.c.l.b16 %v204
    %v370 = vunpack.c.h.b16 %v204
    %v371 = vunpack.c.l.b16 %v205
    %v372 = vunpack.c.h.b16 %v205
    %v373 = vunpack.c.l.b16 %v206
    %v374 = vunpack.c.h.b16 %v206
    %v375 = vunpack.c.l.b16 %v207
    %v376 = vunpack.c.h.b16 %v207
    %v377 = vunpack.c.l.b16 %v208
    %v378 = vunpack.c.h.b16 %v208
    %v379 = vunpack.c.l.b16 %v209
    %v380 = vunpack.c.h.b16 %v209
    %v381 = vunpack.c.l.b16 %v210
    %v382 = vunpack.c.h.b16 %v210
    %v383 = vunpack.c.l.b16 %v211
    %v384 = vunpack.c.h.b16 %v211
    %v385 = vunpack.c.l.b16 %v212
    %v386 = vunpack.c.h.b16 %v212
    %v387 = vunpack.c.l.b16 %v213
    %v388 = vunpack.c.h.b16 %v213
    %v389 = vunpack.c.l.b16 %v214
    %v390 = vunpack.c.h.b16 %v214
    %v391 = vunpack.c.l.b16 %v215
    %v392 = vunpack.c.h.b16 %v215
    %v393 = vunpack.c.l.b16 %v216
    %v394 = vunpack.c.h.b16 %v216
    %v395 = vunpack.c.l.b16 %v217
    %v396 = vunpack.c.h.b16 %v217
    %v397 = vunpack.c.l.b16 %v218
    %v398 = vunpack.c.h.b16 %v218
    %v399 = vunpack.c.l.b16 %v219
    %v400 = vunpack.c.h.b16 %v219
    %v401 = vunpack.c.l.b16 %v220
    %v402 = vunpack.c.h.b16 %v220
    %v403 = vunpack.c.l.b16 %v221
    %v404 = vunpack.c.h.b16 %v221
    %v405 = vunpack.c.l.b16 %v222
    %v406 = vunpack.c.h.b16 %v222
    %v407 = vunpack.c.l.b16 %v223
    %v408 = vunpack.c.h.b16 %v223
    %v409 = vunpack.c.l.b16 %v224
    %v410 = vunpack.c.h.b16 %v224
    %v411 = vunpack.c.l.b16 %v225
    %v412 = vunpack.c.h.b16 %v225
    %v413 = vunpack.c.l.b16 %v226
    %v414 = vunpack.c.h.b16 %v226
    %v415 = vunpack.c.l.b16 %v227
    %v416 = vunpack.c.h.b16 %v227
    %v417 = vunpack.c.l.b16 %v228
    %v418 = vunpack.c.h.b16 %v228
    %v419 = vunpack.c.l.b16 %v229
    %v420 = vunpack.c.h.b16 %v229
    %v421 = vunpack.c.l.b16 %v230
    %v422 = vunpack.c.h.b16 %v230
    %v423 = vunpack.c.l.b16 %v231
    %v424 = vunpack.c.h.b16 %v231
    %v425 = vunpack.c.l.b16 %v232
    %v426 = vunpack.c.h.b16 %v232
    %v427 = vunpack.c.l.b16 %v233
    %v428 = vunpack.c.h.b16 %v233
    %v429 = vunpack.c.l.b16 %v234
    %v430 = vunpack.c.h.b16 %v234
    %v431 = vunpack.c.l.b16 %v235
    %v432 = vunpack.c.h.b16 %v235
    %v433 = vunpack.c.l.b16 %v236
    %v434 = vunpack.c.h.b16 %v236
    %v435 = vunpack.c.l.b16 %v237
    %v436 = vunpack.c.h.b16 %v237
    %v437 = vunpack.c.l.b16 %v238
    %v438 = vunpack.c.h.b16 %v238
    %v439 = vunpack.c.l.b16 %v239
    %v440 = vunpack.c.h.b16 %v239
    %v441 = vunpack.c.l.b16 %v240
    %v442 = vunpack.c.h.b16 %v240
    %v443 = vunpack.c.l.b16 %v241
    %v444 = vunpack.c.h.b16 %v241
    %v445 = vunpack.c.l.b16 %v242
    %v446 = vunpack.c.h.b16 %v242
    %v447 = vunpack.c.l.b16 %v243
    %v448 = vunpack.c.h.b16 %v243
    %v449 = vunpack.c.l.b16 %v244
    %v450 = vunpack.c.h.b16 %v244
    %v451 = vunpack.c.l.b16 %v245
    %v452 = vunpack.c.h.b16 %v245
    %v453 = vunpack.c.l.b16 %v246
    %v454 = vunpack.c.h.b16 %v246
    %v455 = vunpack.c.l.b16 %v247
    %v456 = vunpack.c.h.b16 %v247
    %v457 = vunpack.c.l.b16 %v248
    %v458 = vunpack.c.h.b16 %v248
    %v459 = vunpack.c.l.b16 %v249
    %v460 = vunpack.c.h.b16 %v249
    %v461 = vunpack.c.l.b16 %v250
    %v462 = vunpack.c.h.b16 %v250
    %v463 = vunpack.c.l.b16 %v251
    %v464 = vunpack.c.h.b16 %v251
    %v465 = vunpack.c.l.b16 %v252
    %v466 = vunpack.c.h.b16 %v252
    %v467 = vpack.c.b16 %v343, %v339
    %v468 = vpack.c.b16 %v344, %v340
    %v469 = vpack.c.b16 %v345, %v341
    %v470 = vpack.c.b16 %v346, %v342
    %v471 = vpack.c.b16 %v351, %v347
    %v472 = vpack.c.b16 %v352, %v348
    %v473 = vpack.c.b16 %v353, %v349
    %v474 = vpack.c.b16 %v354, %v350
    %v475 = vpack.c.b16 %v359, %v355
    %v476 = vpack.c.b16 %v360, %v356
    %v477 = vpack.c.b16 %v361, %v357
    %v478 = vpack.c.b16 %v362, %v358
    %v479 = vpack.c.b16 %v367, %v363
    %v480 = vpack.c.b16 %v368, %v364
    %v481 = vpack.c.b16 %v369, %v365
    %v482 = vpack.c.b16 %v370, %v366
    %v483 = vpack.c.b16 %v375, %v371
    %v484 = vpack.c.b16 %v376, %v372
    %v485 = vpack.c.b16 %v377, %v373
    %v486 = vpack.c.b16 %v378, %v374
    %v487 = vpack.c.b16 %v383, %v379
    %v488 = vpack.c.b16 %v384, %v380
    %v489 = vpack.c.b16 %v385, %v381
    %v490 = vpack.c.b16 %v386, %v382
    %v491 = vpack.c.b16 %v391, %v387
    %v492 = vpack.c.b16 %v392, %v388
    %v493 = vpack.c.b16 %v393, %v389
    %v494 = vpack.c.b16 %v394, %v390
    %v495 = vpack.c.b16 %v399, %v395
    %v496 = vpack.c.b16 %v400, %v396
    %v497 = vpack.c.b16 %v401, %v397
    %v498 = vpack.c.b16 %v402, %v398
    %v499 = vpack.c.b16 %v407, %v403
    %v500 = vpack.c.b16 %v408, %v404
    %v501 = vpack.c.b16 %v409, %v405
    %v502 = vpack.c.b16 %v410, %v406
    %v503 = vpack.c.b16 %v415, %v411
    %v504 = vpack.c.b16 %v416, %v412
    %v505 = vpack.c.b16 %v417, %v413
    %v506 = vpack.c.b16 %v418, %v414
    %v507 = vpack.c.b16 %v423, %v419
    %v508 = vpack.c.b16 %v424, %v420
    %v509 = vpack.c.b16 %v425, %v421
    %v510 = vpack.c.b16 %v426, %v422
    %v511 = vpack.c.b16 %v431, %v427
    %v512 = vpack.c.b16 %v432, %v428
    %v513 = vpack.c.b16 %v433, %v429
    %v514 = vpack.c.b16 %v434, %v430
    %v515 = vpack.c.b16 %v439, %v435
    %v516 = vpack.c.b16 %v440, %v436
    %v517 = vpack.c.b16 %v441, %v437
    %v518 = vpack.c.b16 %v442, %v438
    %v519 = vpack.c.b16 %v447, %v443
    %v520 = vpack.c.b16 %v448, %v444
    %v521 = vpack.c.b16 %v449, %v445
    %v522 = vpack.c.b16 %v450, %v446
    %v523 = vpack.c.b16 %v455, %v451
    %v524 = vpack.c.b16 %v456, %v452
    %v525 = vpack.c.b16 %v457, %v453
    %v526 = vpack.c.b16 %v458, %v454
    %v527 = vpack.c.b16 %v463, %v459
    %v528 = vpack.c.b16 %v464, %v460
    %v529 = vpack.c.b16 %v465, %v461
    %v530 = vpack.c.b16 %v466, %v462
    %595 = vmatprep.subr.bf16.mxu0 %v496
    %596 = vmatpush1.bf16.msra.mxu0 %v495
    %597 = vmatprep.subr.bf16.mxu0 %v492
    %598 = vmatpush1.bf16.msra.mxu0 %v491
    %599 = vmatprep.subr.bf16.mxu0 %v488
    %600 = vmatpush1.bf16.msra.mxu0 %v487
    %601 = vmatprep.subr.bf16.mxu0 %v484
    %602 = vmatpush1.bf16.msra.mxu0 %v483
    %603 = vmatprep.subr.bf16.mxu0 %v480
    %604 = vmatpush1.bf16.msra.mxu0 %v479
    %605 = vmatprep.subr.bf16.mxu0 %v476
    %606 = vmatpush1.bf16.msra.mxu0 %v475
    %607 = vmatprep.subr.bf16.mxu0 %v472
    %608 = vmatpush1.bf16.msra.mxu0 %v471
    %609 = vmatprep.subr.bf16.mxu0 %v468
    %610 = vmatpush1.bf16.msra.mxu0 %v467
    %611 = vmatprep.subr.bf16.mxu0 %v528
    %612 = vmatpush2.bf16.msra.mxu0 %v527
    %613 = vmatprep.subr.bf16.mxu0 %v524
    %614 = vmatpush2.bf16.msra.mxu0 %v523
    %615 = vmatprep.subr.bf16.mxu0 %v520
    %616 = vmatpush2.bf16.msra.mxu0 %v519
    %617 = vmatprep.subr.bf16.mxu0 %v516
    %618 = vmatpush2.bf16.msra.mxu0 %v515
    %619 = vmatprep.subr.bf16.mxu0 %v512
    %620 = vmatpush2.bf16.msra.mxu0 %v511
    %621 = vmatprep.subr.bf16.mxu0 %v508
    %622 = vmatpush2.bf16.msra.mxu0 %v507
    %623 = vmatprep.subr.bf16.mxu0 %v504
    %624 = vmatpush2.bf16.msra.mxu0 %v503
    %625 = vmatprep.subr.bf16.mxu0 %v500
    %626 = vmatpush2.bf16.msra.mxu0 %v499
    %627 = vmatprep.mubr.bf16.mxu0 %v188
    %628 = vmatmul.mubr.bf16.gmra.mxu0 %v187
    %v629 = vpop.f32.mrf.mxu0
    %v630 = vadd.f32 %v258, %v629
    %v631 = vpop.f32.mrf.mxu0
    %v632 = vadd.f32 %v262, %v631
    %v633 = vpop.f32.mrf.mxu0
    %v634 = vpop.f32.mrf.mxu0
    %635 = vdwg.mxu0
    %636 = vmatprep.subr.bf16.mxu0 %v498
    %637 = vmatpush1.bf16.msra.mxu0 %v497
    %638 = vmatprep.subr.bf16.mxu0 %v494
    %639 = vmatpush1.bf16.msra.mxu0 %v493
    %640 = vmatprep.subr.bf16.mxu0 %v490
    %641 = vmatpush1.bf16.msra.mxu0 %v489
    %642 = vmatprep.subr.bf16.mxu0 %v486
    %643 = vmatpush1.bf16.msra.mxu0 %v485
    %644 = vmatprep.subr.bf16.mxu0 %v482
    %645 = vmatpush1.bf16.msra.mxu0 %v481
    %646 = vmatprep.subr.bf16.mxu0 %v478
    %647 = vmatpush1.bf16.msra.mxu0 %v477
    %648 = vmatprep.subr.bf16.mxu0 %v474
    %649 = vmatpush1.bf16.msra.mxu0 %v473
    %650 = vmatprep.subr.bf16.mxu0 %v470
    %651 = vmatpush1.bf16.msra.mxu0 %v469
    %652 = vmatprep.subr.bf16.mxu0 %v530
    %653 = vmatpush2.bf16.msra.mxu0 %v529
    %654 = vmatprep.subr.bf16.mxu0 %v526
    %655 = vmatpush2.bf16.msra.mxu0 %v525
    %656 = vmatprep.subr.bf16.mxu0 %v522
    %657 = vmatpush2.bf16.msra.mxu0 %v521
    %658 = vmatprep.subr.bf16.mxu0 %v518
    %659 = vmatpush2.bf16.msra.mxu0 %v517
    %660 = vmatprep.subr.bf16.mxu0 %v514
    %661 = vmatpush2.bf16.msra.mxu0 %v513
    %662 = vmatprep.subr.bf16.mxu0 %v510
    %663 = vmatpush2.bf16.msra.mxu0 %v509
    %664 = vmatprep.subr.bf16.mxu0 %v506
    %665 = vmatpush2.bf16.msra.mxu0 %v505
    %666 = vmatprep.subr.bf16.mxu0 %v502
    %667 = vmatpush2.bf16.msra.mxu0 %v501
    %668 = vmatprep.mubr.bf16.mxu0 %v188
    %669 = vmatmul.mubr.bf16.gmra.mxu0 %v187
    %v670 = vpop.f32.mrf.mxu0
    %v671 = vadd.f32 %v266, %v670
    %v672 = vpop.f32.mrf.mxu0
    %v673 = vadd.f32 %v270, %v672
    %v674 = vpop.f32.mrf.mxu0
    %v675 = vpop.f32.mrf.mxu0
    %676 = vdwg.mxu0
    %v677 = vxor.u32 %v630, 2147483648
    %v678 = vmul.f32 %v677, 1.442695
    %v679 = vpow.pop %v678
    %v680 = vadd.f32 %v679, 1.0
    %v681 = vrcp.pop %v680
    %v682 = vmul.f32 1.0, %v681
    %v683 = vxor.u32 %v632, 2147483648
    %v684 = vmul.f32 %v683, 1.442695
    %v685 = vpow.pop %v684
    %v686 = vadd.f32 %v685, 1.0
    %v687 = vrcp.pop %v686
    %v688 = vmul.f32 1.0, %v687
    %v689 = vmul.f32 %v682, %v673
    %v690 = vadd.f32 %v671, %v689
    %v691 = vtanh.pop %v690
    %v692 = vsub.f32 1.0, %v688
    %v693 = vmul.f32 %v692, %v691
    %v694 = vmul.f32 %v688, %v186
    %v695 = vadd.f32 %v693, %v694
    %696 = vst [vmem:[#allocation9] sm:$0xff] %v695
    %v697 = vpack.c.bf16 %v695, %v695
    %v698 = vld [vmem:[#allocation7] sm:$0xf]
    %v699 = vld [vmem:[#allocation7 + $0x4] sm:$0xf]
    %v700 = vld [vmem:[#allocation7 + $0x8] sm:$0xf]
    %v701 = vld [vmem:[#allocation7 + $0xc] sm:$0xf]
    %v702 = vld [vmem:[#allocation7 + $0x10] sm:$0xf]
    %v703 = vld [vmem:[#allocation7 + $0x14] sm:$0xf]
    %v704 = vld [vmem:[#allocation7 + $0x18] sm:$0xf]
    %v705 = vld [vmem:[#allocation7 + $0x1c] sm:$0xf]
    %v706 = vld [vmem:[#allocation7 + $0x20] sm:$0xf]
    %v707 = vld [vmem:[#allocation7 + $0x24] sm:$0xf]
    %v708 = vld [vmem:[#allocation7 + $0x28] sm:$0xf]
    %v709 = vld [vmem:[#allocation7 + $0x2c] sm:$0xf]
    %v710 = vld [vmem:[#allocation7 + $0x30] sm:$0xf]
    %v711 = vld [vmem:[#allocation7 + $0x34] sm:$0xf]
    %v712 = vld [vmem:[#allocation7 + $0x38] sm:$0xf]
    %v713 = vld [vmem:[#allocation7 + $0x3c] sm:$0xf]
    %v714 = vld [vmem:[%s6] sm:$0x1]
    %v716 = vlaneseq
    %v717 = vshrl.u32 %v716, 7
    %v718 = vsub.s32 0, %v717
    %v719 = vrot.slane %v714, %v718
    %v737 = vunpack.c.l.b16 %v698
    %v738 = vunpack.c.l.b16 %v699
    %v739 = vunpack.c.l.b16 %v700
    %v740 = vunpack.c.l.b16 %v701
    %v741 = vunpack.c.l.b16 %v702
    %v742 = vunpack.c.l.b16 %v703
    %v743 = vunpack.c.l.b16 %v704
    %v744 = vunpack.c.l.b16 %v705
    %v745 = vunpack.c.l.b16 %v706
    %v746 = vunpack.c.l.b16 %v707
    %v747 = vunpack.c.l.b16 %v708
    %v748 = vunpack.c.l.b16 %v709
    %v749 = vunpack.c.l.b16 %v710
    %v750 = vunpack.c.l.b16 %v711
    %v751 = vunpack.c.l.b16 %v712
    %v752 = vunpack.c.l.b16 %v713
    %v753 = vpack.c.b16 %v738, %v737
    %v754 = vpack.c.b16 %v740, %v739
    %v755 = vpack.c.b16 %v742, %v741
    %v756 = vpack.c.b16 %v744, %v743
    %v757 = vpack.c.b16 %v746, %v745
    %v758 = vpack.c.b16 %v748, %v747
    %v759 = vpack.c.b16 %v750, %v749
    %v760 = vpack.c.b16 %v752, %v751
    %769 = vmatprep.subr.bf16.mxu0 0
    %770 = vmatpush1.bf16.msra.mxu0 %v760
    %771 = vmatprep.subr.bf16.mxu0 0
    %772 = vmatpush1.bf16.msra.mxu0 %v759
    %773 = vmatprep.subr.bf16.mxu0 0
    %774 = vmatpush1.bf16.msra.mxu0 %v758
    %775 = vmatprep.subr.bf16.mxu0 0
    %776 = vmatpush1.bf16.msra.mxu0 %v757
    %777 = vmatprep.subr.bf16.mxu0 0
    %778 = vmatpush1.bf16.msra.mxu0 %v756
    %779 = vmatprep.subr.bf16.mxu0 0
    %780 = vmatpush1.bf16.msra.mxu0 %v755
    %781 = vmatprep.subr.bf16.mxu0 0
    %782 = vmatpush1.bf16.msra.mxu0 %v754
    %783 = vmatprep.subr.bf16.mxu0 0
    %784 = vmatpush1.bf16.msra.mxu0 %v753
    %785 = vmatprep.subr.bf16.mxu0 0
    %786 = vmatpush2.bf16.msra.mxu0 0
    %787 = vmatprep.subr.bf16.mxu0 0
    %788 = vmatpush2.bf16.msra.mxu0 0
    %789 = vmatprep.subr.bf16.mxu0 0
    %790 = vmatpush2.bf16.msra.mxu0 0
    %791 = vmatprep.subr.bf16.mxu0 0
    %792 = vmatpush2.bf16.msra.mxu0 0
    %793 = vmatprep.subr.bf16.mxu0 0
    %794 = vmatpush2.bf16.msra.mxu0 0
    %795 = vmatprep.subr.bf16.mxu0 0
    %796 = vmatpush2.bf16.msra.mxu0 0
    %797 = vmatprep.subr.bf16.mxu0 0
    %798 = vmatpush2.bf16.msra.mxu0 0
    %799 = vmatprep.subr.bf16.mxu0 0
    %800 = vmatpush2.bf16.msra.mxu0 0
    %801 = vmatprep.mubr.bf16.mxu0 0
    %802 = vmatmul.mubr.bf16.gmra.mxu0 %v697
    %v803 = vpop.f32.mrf.mxu0
    %v804 = vadd.f32 %v719, %v803
    %v805 = vpop.f32.mrf.mxu0
    %v806 = vpop.f32.mrf.mxu0
    %v807 = vpop.f32.mrf.mxu0
    %808 = vdwg.mxu0
    %vm809 = vcmp.lt.s32.totalorder %v74, 16
    %v810 = vsel %vm809, %v804, -1e+30
    %811 = vmax.xlane.f32.xlu0 %v810
    %v812 = vpop.xlane.xlu0 %811
    %v813 = vsub.f32 %v810, %v812
    %v814 = vmul.f32 %v813, 1.442695
    %v815 = vpow.pop %v814
    %816 = vadd.xlane.f32.xlu0 %v815
    %v817 = vpop.xlane.xlu0 %816
    %v818 = vlog2.pop %v817
    %v819 = vmul.f32 %v818, 0.6931472
    %v820 = vsub.f32 %v813, %v819
    %821 = vst [vmem:[#allocation8] sm:$0xff] %v820
    // Predicated region
    $region42: #{tpu_custom_call.1} parent=1 // pred_check
      _
    $region43: #{tpu_custom_call.1} parent=1 // pred_check_branch
      %823 = sbr.rel (0) target = $region45
    $region44: #{tpu_custom_call.1} parent=1 // pred_region
      %s825 = ssub.s32 128, 128
      %826 = vsyncadd [#allocation4], %s825
      %s828 = sshll.u32 [#allocation8], 4
      %s829 = int_to_ptr.vmem [resolvable:$true] %s828
      %831 = dma.vmem_to_hbm [thread:$0]  %s829, 128, %s7, [#allocation4]
    $region45: #{tpu_custom_call.1} parent=1 // pred_fallthru
      _
    // Predicated region
    $region46: #{tpu_custom_call.1} parent=1 // pred_check
      _
    $region47: #{tpu_custom_call.1} parent=1 // pred_check_branch
      %833 = sbr.rel (0) target = $region49
    $region48: #{tpu_custom_call.1} parent=1 // pred_region
      %s835 = ssub.s32 128, 128
      %836 = vsyncadd [#allocation10], %s835
      %s838 = sshll.u32 [#allocation9], 4
      %s839 = int_to_ptr.vmem [resolvable:$true] %s838
      %841 = dma.vmem_to_hbm [thread:$0]  %s839, 128, %s8, [#allocation10]
    $region49: #{tpu_custom_call.1} parent=1 // pred_fallthru
      _
    // Predicated region
    $region50: #{tpu_custom_call.1} parent=1 // pred_check
      _
    $region51: #{tpu_custom_call.1} parent=1 // pred_check_branch
      %843 = sbr.rel (0) target = $region53
    $region52: #{tpu_custom_call.1} parent=1 // pred_region
      %844 = dma.done [#allocation4], 128
    $region53: #{tpu_custom_call.1} parent=1 // pred_fallthru
      _
    // Predicated region
    $region54: #{tpu_custom_call.1} parent=1 // pred_check
      _
    $region55: #{tpu_custom_call.1} parent=1 // pred_check_branch
      %846 = sbr.rel (0) target = $region57
    $region56: #{tpu_custom_call.1} parent=1 // pred_region
      %847 = dma.done [#allocation10], 128
    $region57: #{tpu_custom_call.1} parent=1 // pred_fallthru
      _
    %848 = vsyncpa [#allocation3], 1
    %849 = vsyncpa [#allocation6], 1
    %850 = vsyncpa [#allocation4], 1
    %851 = vsyncpa [#allocation10], 1

</llo_original>
